<compile_context>
chip_gen: v6e
topology: v6e:2x2x1
jax: 0.10.0
libtpu: 0.0.40
codegen_flags: <defaults>
</compile_context>

<pallas_src>
import jax
import jax.numpy as jnp
from jax.experimental import pallas as pl
from jax.experimental.pallas import tpu as pltpu

_LANE = 128


def _round_up(n, m):
    return ((n + m - 1) // m) * m


def _pad2d(a, rows, cols):
    r, c = a.shape
    return jnp.pad(a, ((0, rows - r), (0, cols - c)))


def _mlp_kernel(x_ref,
                w1_ref, b1_ref,
                w2_ref, b2_ref,
                w3_ref, b3_ref,
                w4_ref, b4_ref,
                o_ref):
    # f32 MXU matmuls with f32 accumulation. Hidden dims are zero-padded to 128
    # lanes (zero weight cols/rows, zero bias lanes), so padded lanes are
    # exactly 0 after each ReLU and contribute nothing to later layers.
    h = jnp.dot(x_ref[...], w1_ref[...], preferred_element_type=jnp.float32)
    h = jnp.maximum(h + b1_ref[...], 0.0)
    h = jnp.dot(h, w2_ref[...], preferred_element_type=jnp.float32)
    h = jnp.maximum(h + b2_ref[...], 0.0)
    h = jnp.dot(h, w3_ref[...], preferred_element_type=jnp.float32)
    h = jnp.maximum(h + b3_ref[...], 0.0)
    o = jnp.dot(h, w4_ref[...], preferred_element_type=jnp.float32) + b4_ref[...]
    o_ref[...] = o.astype(o_ref.dtype)


def prepare_params(params):
    """Pad weights/biases ONCE (call outside the per-step forward).

    W1 keeps its true row count so x can be fed unpadded; W4 keeps its true
    column count so the output is emitted unpadded. Hidden feature dims are
    zero-padded up to a multiple of 128 so the resident weight tiles are full
    (8,128) tiles in VMEM.
    """
    W1, W2, W3, W4 = (params[f"W{i}"] for i in (1, 2, 3, 4))
    b1, b2, b3, b4 = (params[f"b{i}"] for i in (1, 2, 3, 4))
    in_size = W1.shape[0]
    out_size = W4.shape[1]
    H1, H2, H3 = (_round_up(d, _LANE) for d in (W1.shape[1], W2.shape[1], W3.shape[1]))
    return {
        "W1": _pad2d(W1, in_size, H1), "b1": _pad2d(b1, 1, H1),
        "W2": _pad2d(W2, H1, H2),      "b2": _pad2d(b2, 1, H2),
        "W3": _pad2d(W3, H2, H3),      "b3": _pad2d(b3, 1, H3),
        "W4": _pad2d(W4, H3, out_size), "b4": _pad2d(b4, 1, out_size),
    }


def _choose_batch_tiling(batch, batch_tile):
    """Return (padded_batch, tile): tile % 8 == 0 and padded_batch % tile == 0.

    Prefers a tile dividing the 8-rounded batch (zero wasted rows) and, when
    the batch is big enough, >=2 grid steps so the 'parallel' batch axis can
    shard across both v7x TensorCores (harmless on single-TC v5e/v6e).
    """
    pb8 = max(8, _round_up(batch, 8))
    target = max(8, min(batch_tile, _round_up(pl.cdiv(pb8, 2), 8)))
    for t in range(target, 7, -8):
        if pb8 % t == 0:
            if t * 4 >= target:        # divisor reasonably close to the target tile
                return pb8, t
            break                      # only tiny divisors exist -> pad instead
    return _round_up(batch, target), target


def mlp_regressor_forward(x, padded_params, *, batch_tile=4096):
    """x: (batch, input_size) f32.  padded_params: output of prepare_params()."""
    batch, input_size = x.shape
    out_size = padded_params["W4"].shape[1]
    H1 = padded_params["W1"].shape[1]
    H2 = padded_params["W2"].shape[1]
    H3 = padded_params["W3"].shape[1]

    pb, tb = _choose_batch_tiling(batch, batch_tile)
    xp = x if pb == batch else jnp.pad(x, ((0, pb - batch), (0, 0)))

    grid = (pb // tb,)

    x_spec = pl.BlockSpec((tb, input_size), lambda i: (i, 0))
    out_spec = pl.BlockSpec((tb, out_size), lambda i: (i, 0))

    def const_spec(arr):  # resident across all grid steps (fetched once)
        return pl.BlockSpec(arr.shape, lambda i: (0, 0))

    bytes_f32 = 4
    w_bytes = sum(p.shape[0] * p.shape[1] * bytes_f32 for p in padded_params.values())
    io_tile_bytes = 2 * tb * (input_size + out_size) * bytes_f32      # double-buffered
    act_bytes = 4 * tb * max(H1, H2, H3) * bytes_f32                  # live intermediates
    vmem_need = io_tile_bytes + w_bytes + act_bytes
    vmem_limit = int(min(max(2 * vmem_need, 8 << 20), 32 << 20))

    cost = pl.CostEstimate(
        flops=2 * pb * (input_size * H1 + H1 * H2 + H2 * H3 + H3 * out_size),
        transcendentals=0,
        bytes_accessed=pb * (input_size + out_size) * bytes_f32 + w_bytes,
    )

    out = pl.pallas_call(
        _mlp_kernel,
        out_shape=jax.ShapeDtypeStruct((pb, out_size), jnp.float32),
        grid=grid,
        in_specs=[
            x_spec,
            const_spec(padded_params["W1"]), const_spec(padded_params["b1"]),
            const_spec(padded_params["W2"]), const_spec(padded_params["b2"]),
            const_spec(padded_params["W3"]), const_spec(padded_params["b3"]),
            const_spec(padded_params["W4"]), const_spec(padded_params["b4"]),
        ],
        out_specs=out_spec,
        compiler_params=pltpu.CompilerParams(
            dimension_semantics=("parallel",),
            vmem_limit_bytes=vmem_limit,
        ),
        cost_estimate=cost,
    )(xp,
      padded_params["W1"], padded_params["b1"],
      padded_params["W2"], padded_params["b2"],
      padded_params["W3"], padded_params["b3"],
      padded_params["W4"], padded_params["b4"])

    return out[:batch]


def init_params(key, input_size, hidden_size=64, output_size=1):
    """Deterministic init mimicking nn.Linear's uniform(-1/sqrt(fan_in), ...)."""
    dims = [
        (input_size, hidden_size // 2),   # fc1
        (hidden_size // 2, hidden_size),  # fc2
        (hidden_size, hidden_size // 2),  # fc3
        (hidden_size // 2, output_size),  # fc4
    ]
    params = {}
    keys = jax.random.split(key, 2 * len(dims))
    for i, (fan_in, fan_out) in enumerate(dims):
        bound = 1.0 / jnp.sqrt(jnp.float32(fan_in))
        params[f"W{i + 1}"] = jax.random.uniform(
            keys[2 * i], (fan_in, fan_out), jnp.float32, -bound, bound)
        params[f"b{i + 1}"] = jax.random.uniform(
            keys[2 * i + 1], (1, fan_out), jnp.float32, -bound, bound)
    return params


def mlp_reference(x, params):
    h = jnp.maximum(x @ params["W1"] + params["b1"], 0.0)
    h = jnp.maximum(h @ params["W2"] + params["b2"], 0.0)
    h = jnp.maximum(h @ params["W3"] + params["b3"], 0.0)
    return h @ params["W4"] + params["b4"]


if __name__ == "__main__":
    key = jax.random.PRNGKey(0)
    k_param, k_x = jax.random.split(key)

    batch, input_size, hidden_size, output_size = 8, 16, 64, 1

    params = init_params(k_param, input_size, hidden_size, output_size)
    padded_params = prepare_params(params)   # pad weights once, not per forward
    x = jax.random.normal(k_x, (batch, input_size), jnp.float32)

    out = mlp_regressor_forward(x, padded_params)
    out = jax.block_until_ready(out)

    ref = mlp_reference(x, params)
    assert out.shape == (batch, output_size)
    assert jnp.allclose(out, ref, atol=1e-5, rtol=1e-5)

    print("KERNEL_OK")
</pallas_src>

<mosaic_0001>
module attributes {stable_mosaic.version = 11 : i64} {
  func.func @_mlp_kernel(%arg0: i32, %arg1: memref<8x16xf32, #tpu.memory_space<vmem>>, %arg2: memref<16x128xf32, #tpu.memory_space<vmem>>, %arg3: memref<1x128xf32, #tpu.memory_space<vmem>>, %arg4: memref<128x128xf32, #tpu.memory_space<vmem>>, %arg5: memref<1x128xf32, #tpu.memory_space<vmem>>, %arg6: memref<128x128xf32, #tpu.memory_space<vmem>>, %arg7: memref<1x128xf32, #tpu.memory_space<vmem>>, %arg8: memref<128x1xf32, #tpu.memory_space<vmem>>, %arg9: memref<1x1xf32, #tpu.memory_space<vmem>>, %arg10: memref<8x1xf32, #tpu.memory_space<vmem>>) attributes {dimension_semantics = [#tpu.dimension_semantics<parallel>], iteration_bounds = array<i64: 1>, scalar_prefetch = 0 : i64, scratch_operands = 0 : i64, tpu.core_type = #tpu.core_type<tc>, window_params = [{transform_indices = @transform_0, window_bounds = array<i64: 8, 16>}, {pipeline_mode = #tpu.pipeline_mode<synchronous>, transform_indices = @transform_1, window_bounds = array<i64: 16, 128>}, {pipeline_mode = #tpu.pipeline_mode<synchronous>, transform_indices = @transform_2, window_bounds = array<i64: 1, 128>}, {pipeline_mode = #tpu.pipeline_mode<synchronous>, transform_indices = @transform_3, window_bounds = array<i64: 128, 128>}, {pipeline_mode = #tpu.pipeline_mode<synchronous>, transform_indices = @transform_4, window_bounds = array<i64: 1, 128>}, {pipeline_mode = #tpu.pipeline_mode<synchronous>, transform_indices = @transform_5, window_bounds = array<i64: 128, 128>}, {pipeline_mode = #tpu.pipeline_mode<synchronous>, transform_indices = @transform_6, window_bounds = array<i64: 1, 128>}, {pipeline_mode = #tpu.pipeline_mode<synchronous>, transform_indices = @transform_7, window_bounds = array<i64: 128, 1>}, {pipeline_mode = #tpu.pipeline_mode<synchronous>, transform_indices = @transform_8, window_bounds = array<i64: 1, 1>}, {transform_indices = @transform_9, window_bounds = array<i64: 8, 1>}]} {
    %c0 = arith.constant 0 : index
    %c0_0 = arith.constant 0 : index
    %0 = vector.load %arg1[%c0, %c0_0] : memref<8x16xf32, #tpu.memory_space<vmem>>, vector<8x16xf32>
    %c0_1 = arith.constant 0 : index
    %c0_2 = arith.constant 0 : index
    %1 = vector.load %arg2[%c0_1, %c0_2] : memref<16x128xf32, #tpu.memory_space<vmem>>, vector<16x128xf32>
    %cst = arith.constant dense<0.000000e+00> : vector<8x128xf32>
    %2 = tpu.matmul %0, %1, %cst {dimension_numbers = #tpu.dot_dimension_numbers<[1], [0], [0], [1], [0, 0, 1, 1], [], []>} : vector<8x16xf32>, vector<16x128xf32>, vector<8x128xf32> -> vector<8x128xf32>
    %c0_3 = arith.constant 0 : index
    %c0_4 = arith.constant 0 : index
    %3 = vector.load %arg3[%c0_3, %c0_4] : memref<1x128xf32, #tpu.memory_space<vmem>>, vector<1x128xf32>
    %4 = vector.broadcast %3 : vector<1x128xf32> to vector<8x128xf32>
    %5 = arith.addf %2, %4 : vector<8x128xf32>
    %cst_5 = arith.constant 0.000000e+00 : f32
    %6 = vector.broadcast %cst_5 : f32 to vector<8x128xf32>
    %7 = arith.maximumf %5, %6 : vector<8x128xf32>
    %c0_6 = arith.constant 0 : index
    %c0_7 = arith.constant 0 : index
    %8 = vector.load %arg4[%c0_6, %c0_7] : memref<128x128xf32, #tpu.memory_space<vmem>>, vector<128x128xf32>
    %cst_8 = arith.constant dense<0.000000e+00> : vector<8x128xf32>
    %9 = tpu.matmul %7, %8, %cst_8 {dimension_numbers = #tpu.dot_dimension_numbers<[1], [0], [0], [1], [0, 0, 1, 1], [], []>} : vector<8x128xf32>, vector<128x128xf32>, vector<8x128xf32> -> vector<8x128xf32>
    %c0_9 = arith.constant 0 : index
    %c0_10 = arith.constant 0 : index
    %10 = vector.load %arg5[%c0_9, %c0_10] : memref<1x128xf32, #tpu.memory_space<vmem>>, vector<1x128xf32>
    %11 = vector.broadcast %10 : vector<1x128xf32> to vector<8x128xf32>
    %12 = arith.addf %9, %11 : vector<8x128xf32>
    %cst_11 = arith.constant 0.000000e+00 : f32
    %13 = vector.broadcast %cst_11 : f32 to vector<8x128xf32>
    %14 = arith.maximumf %12, %13 : vector<8x128xf32>
    %c0_12 = arith.constant 0 : index
    %c0_13 = arith.constant 0 : index
    %15 = vector.load %arg6[%c0_12, %c0_13] : memref<128x128xf32, #tpu.memory_space<vmem>>, vector<128x128xf32>
    %cst_14 = arith.constant dense<0.000000e+00> : vector<8x128xf32>
    %16 = tpu.matmul %14, %15, %cst_14 {dimension_numbers = #tpu.dot_dimension_numbers<[1], [0], [0], [1], [0, 0, 1, 1], [], []>} : vector<8x128xf32>, vector<128x128xf32>, vector<8x128xf32> -> vector<8x128xf32>
    %c0_15 = arith.constant 0 : index
    %c0_16 = arith.constant 0 : index
    %17 = vector.load %arg7[%c0_15, %c0_16] : memref<1x128xf32, #tpu.memory_space<vmem>>, vector<1x128xf32>
    %18 = vector.broadcast %17 : vector<1x128xf32> to vector<8x128xf32>
    %19 = arith.addf %16, %18 : vector<8x128xf32>
    %cst_17 = arith.constant 0.000000e+00 : f32
    %20 = vector.broadcast %cst_17 : f32 to vector<8x128xf32>
    %21 = arith.maximumf %19, %20 : vector<8x128xf32>
    %c0_18 = arith.constant 0 : index
    %c0_19 = arith.constant 0 : index
    %22 = vector.load %arg8[%c0_18, %c0_19] : memref<128x1xf32, #tpu.memory_space<vmem>>, vector<128x1xf32>
    %cst_20 = arith.constant dense<0.000000e+00> : vector<8x1xf32>
    %23 = tpu.matmul %21, %22, %cst_20 {dimension_numbers = #tpu.dot_dimension_numbers<[1], [0], [0], [1], [0, 0, 1, 1], [], []>} : vector<8x128xf32>, vector<128x1xf32>, vector<8x1xf32> -> vector<8x1xf32>
    %c0_21 = arith.constant 0 : index
    %c0_22 = arith.constant 0 : index
    %24 = vector.load %arg9[%c0_21, %c0_22] : memref<1x1xf32, #tpu.memory_space<vmem>>, vector<1x1xf32>
    %25 = vector.broadcast %24 : vector<1x1xf32> to vector<8x1xf32>
    %26 = arith.addf %23, %25 : vector<8x1xf32>
    %c0_23 = arith.constant 0 : index
    %c0_24 = arith.constant 0 : index
    %27 = vector.load %arg10[%c0_23, %c0_24] : memref<8x1xf32, #tpu.memory_space<vmem>>, vector<8x1xf32>
    tpu.vector_store %arg10[%c0_23, %c0_24], %26 {strides = array<i32>} : memref<8x1xf32, #tpu.memory_space<vmem>>, vector<8x1xf32>,
    return
  }
  func.func @transform_0(%arg0: i32) -> (i32, i32) {
    %c0_i32 = arith.constant 0 : i32
    %c0_i32_0 = arith.constant 0 : i32
    return %arg0, %c0_i32 : i32, i32
  }
  func.func @transform_1(%arg0: i32) -> (i32, i32) {
    %c0_i32 = arith.constant 0 : i32
    %c0_i32_0 = arith.constant 0 : i32
    %c0_i32_1 = arith.constant 0 : i32
    return %c0_i32, %c0_i32_0 : i32, i32
  }
  func.func @transform_2(%arg0: i32) -> (i32, i32) {
    %c0_i32 = arith.constant 0 : i32
    %c0_i32_0 = arith.constant 0 : i32
    %c0_i32_1 = arith.constant 0 : i32
    return %c0_i32, %c0_i32_0 : i32, i32
  }
  func.func @transform_3(%arg0: i32) -> (i32, i32) {
    %c0_i32 = arith.constant 0 : i32
    %c0_i32_0 = arith.constant 0 : i32
    %c0_i32_1 = arith.constant 0 : i32
    return %c0_i32, %c0_i32_0 : i32, i32
  }
  func.func @transform_4(%arg0: i32) -> (i32, i32) {
    %c0_i32 = arith.constant 0 : i32
    %c0_i32_0 = arith.constant 0 : i32
    %c0_i32_1 = arith.constant 0 : i32
    return %c0_i32, %c0_i32_0 : i32, i32
  }
  func.func @transform_5(%arg0: i32) -> (i32, i32) {
    %c0_i32 = arith.constant 0 : i32
    %c0_i32_0 = arith.constant 0 : i32
    %c0_i32_1 = arith.constant 0 : i32
    return %c0_i32, %c0_i32_0 : i32, i32
  }
  func.func @transform_6(%arg0: i32) -> (i32, i32) {
    %c0_i32 = arith.constant 0 : i32
    %c0_i32_0 = arith.constant 0 : i32
    %c0_i32_1 = arith.constant 0 : i32
    return %c0_i32, %c0_i32_0 : i32, i32
  }
  func.func @transform_7(%arg0: i32) -> (i32, i32) {
    %c0_i32 = arith.constant 0 : i32
    %c0_i32_0 = arith.constant 0 : i32
    %c0_i32_1 = arith.constant 0 : i32
    return %c0_i32, %c0_i32_0 : i32, i32
  }
  func.func @transform_8(%arg0: i32) -> (i32, i32) {
    %c0_i32 = arith.constant 0 : i32
    %c0_i32_0 = arith.constant 0 : i32
    %c0_i32_1 = arith.constant 0 : i32
    return %c0_i32, %c0_i32_0 : i32, i32
  }
  func.func @transform_9(%arg0: i32) -> (i32, i32) {
    %c0_i32 = arith.constant 0 : i32
    %c0_i32_0 = arith.constant 0 : i32
    return %arg0, %c0_i32 : i32, i32
  }
}

</mosaic_0001>

<llo_original>
// kernel: tpu_custom_call.1
$region0: #{tpu_custom_call.1}
  #allocation0 [shape = 'u32[]', space=smem, size = 0x4, offset = 0x4, fixed_abs, tag = 'smem constant byte address 0x4 - core index']
  #allocation1 [shape = 'u32[144,128]{1,0:T(1,128)}', space=vmem, size = 0x12000, scoped, tag = 'internal scratch']
  #allocation2 [shape = 'f32[1,1]{1,0:T(1,128)S(1)}', space=vmem, size = 0x200, scoped, tag = 'scoped memory for tpu_custom_call.1']
  %s0 = inlined_call_operand.vmem [shape: f32[8,16], index: 0, kind: input, shape index: {}]
  %s1 = inlined_call_operand.hbm [shape: f32[16,128], index: 1, kind: input, shape index: {}]
  %s2 = inlined_call_operand.hbm [shape: f32[1,128], index: 2, kind: input, shape index: {}]
  %s3 = inlined_call_operand.vmem [shape: f32[128,128], index: 3, kind: input, shape index: {}]
  %s4 = inlined_call_operand.vmem [shape: f32[1,128], index: 4, kind: input, shape index: {}]
  %s5 = inlined_call_operand.hbm [shape: f32[128,128], index: 5, kind: input, shape index: {}]
  %s6 = inlined_call_operand.vmem [shape: f32[1,128], index: 6, kind: input, shape index: {}]
  %s7 = inlined_call_operand.vmem [shape: f32[128,1], index: 7, kind: input, shape index: {}]
  %s8 = inlined_call_operand.<no memory space> [shape: f32[1,1], index: 8, kind: input, shape index: {}]
  %s9 = inlined_call_operand.vmem [shape: f32[8,1], index: 9, kind: output, shape index: {}]
  %s10 = sld [smem:[#allocation0]]
  $region58: #{tpu_custom_call.1} parent=0
    _
  %s12 = ssub.s32 1, %s10
  %s13 = scalar_select 0, %s12, %s10
  %v14 = vstv %s8
  %15 = vst [vmem:[#allocation2] sm:$0x1] %v14
  $region1: #{tpu_custom_call.1} parent=0
    #allocation3 [shape = 'u8[8192]{0}', space=vmem, size = 0x2000, scoped, tag = 'input window, operand 1, single buffered']
    #allocation4 [shape = 's32[1]{0}', space=sflag, size = 0x4, scoped, tag = 'scoped memory for tpu_custom_call.1']
    #allocation5 [shape = 'u8[512]{0}', space=vmem, size = 0x400, scoped, tag = 'input window, operand 2, single buffered']
    #allocation6 [shape = 's32[1]{0}', space=sflag, size = 0x4, scoped, tag = 'scoped memory for tpu_custom_call.1']
    #allocation7 [shape = 'u8[65536]{0}', space=vmem, size = 0x10000, scoped, tag = 'input window, operand 5, single buffered']
    %16 = vsyncpa [#allocation4], 0
    %17 = vsyncpa [#allocation6], 0
    // Predicated region
    $region2: #{tpu_custom_call.1} parent=1 // pred_check
      _
    $region3: #{tpu_custom_call.1} parent=1 // pred_check_branch
      %19 = sbr.rel (0) target = $region5
    $region4: #{tpu_custom_call.1} parent=1 // pred_region
      _
    $region5: #{tpu_custom_call.1} parent=1 // pred_fallthru
      _
    // Predicated region
    $region6: #{tpu_custom_call.1} parent=1 // pred_check
      _
    $region7: #{tpu_custom_call.1} parent=1 // pred_check_branch
      %21 = sbr.rel (0) target = $region9
    $region8: #{tpu_custom_call.1} parent=1 // pred_region
      %s23 = ssub.s32 256, 256
      %24 = vsyncadd [#allocation4], %s23
      %s25 = sshll.u32 [#allocation3], 4
      %s26 = int_to_ptr.vmem [resolvable:$true] %s25
      %31 = dma.hbm_to_vmem [thread:$0]  %s1, 256, %s26, [#allocation4], 128, 128, 8
    $region9: #{tpu_custom_call.1} parent=1 // pred_fallthru
      _
    // Predicated region
    $region10: #{tpu_custom_call.1} parent=1 // pred_check
      _
    $region11: #{tpu_custom_call.1} parent=1 // pred_check_branch
      %33 = sbr.rel (0) target = $region13
    $region12: #{tpu_custom_call.1} parent=1 // pred_region
      %s35 = ssub.s32 16, 16
      %36 = vsyncadd [#allocation6], %s35
      %s38 = sshll.u32 [#allocation5], 4
      %s39 = int_to_ptr.vmem [resolvable:$true] %s38
      %41 = dma.hbm_to_vmem [thread:$0]  %s2, 16, %s39, [#allocation6]
    $region13: #{tpu_custom_call.1} parent=1 // pred_fallthru
      _
    // Predicated region
    $region14: #{tpu_custom_call.1} parent=1 // pred_check
      _
    $region15: #{tpu_custom_call.1} parent=1 // pred_check_branch
      %43 = sbr.rel (0) target = $region17
    $region16: #{tpu_custom_call.1} parent=1 // pred_region
      _
    $region17: #{tpu_custom_call.1} parent=1 // pred_fallthru
      _
    // Predicated region
    $region18: #{tpu_custom_call.1} parent=1 // pred_check
      _
    $region19: #{tpu_custom_call.1} parent=1 // pred_check_branch
      %45 = sbr.rel (0) target = $region21
    $region20: #{tpu_custom_call.1} parent=1 // pred_region
      _
    $region21: #{tpu_custom_call.1} parent=1 // pred_fallthru
      _
    // Predicated region
    $region22: #{tpu_custom_call.1} parent=1 // pred_check
      _
    $region23: #{tpu_custom_call.1} parent=1 // pred_check_branch
      %47 = sbr.rel (0) target = $region25
    $region24: #{tpu_custom_call.1} parent=1 // pred_region
      %s49 = ssub.s32 2048, 2048
      %50 = vsyncadd [#allocation6], %s49
      %s51 = sshll.u32 [#allocation7], 4
      %s52 = int_to_ptr.vmem [resolvable:$true] %s51
      %57 = dma.hbm_to_vmem [thread:$0]  %s5, 2048, %s52, [#allocation6], 128, 128, 8
    $region25: #{tpu_custom_call.1} parent=1 // pred_fallthru
      _
    // Predicated region
    $region26: #{tpu_custom_call.1} parent=1 // pred_check
      _
    $region27: #{tpu_custom_call.1} parent=1 // pred_check_branch
      %59 = sbr.rel (0) target = $region29
    $region28: #{tpu_custom_call.1} parent=1 // pred_region
      _
    $region29: #{tpu_custom_call.1} parent=1 // pred_fallthru
      _
    // Predicated region
    $region30: #{tpu_custom_call.1} parent=1 // pred_check
      _
    $region31: #{tpu_custom_call.1} parent=1 // pred_check_branch
      %61 = sbr.rel (0) target = $region33
    $region32: #{tpu_custom_call.1} parent=1 // pred_region
      _
    $region33: #{tpu_custom_call.1} parent=1 // pred_fallthru
      _
    // Predicated region
    $region34: #{tpu_custom_call.1} parent=1 // pred_check
      _
    $region35: #{tpu_custom_call.1} parent=1 // pred_check_branch
      %63 = sbr.rel (0) target = $region37
    $region36: #{tpu_custom_call.1} parent=1 // pred_region
      _
    $region37: #{tpu_custom_call.1} parent=1 // pred_fallthru
      _
    // Predicated region
    $region38: #{tpu_custom_call.1} parent=1 // pred_check
      _
    $region39: #{tpu_custom_call.1} parent=1 // pred_check_branch
      %65 = sbr.rel (0) target = $region41
    $region40: #{tpu_custom_call.1} parent=1 // pred_region
      %66 = dma.done [#allocation4], 256
    $region41: #{tpu_custom_call.1} parent=1 // pred_fallthru
      _
    // Predicated region
    $region42: #{tpu_custom_call.1} parent=1 // pred_check
      _
    $region43: #{tpu_custom_call.1} parent=1 // pred_check_branch
      %68 = sbr.rel (0) target = $region45
    $region44: #{tpu_custom_call.1} parent=1 // pred_region
      %69 = dma.done [#allocation6], 16
    $region45: #{tpu_custom_call.1} parent=1 // pred_fallthru
      _
    // Predicated region
    $region46: #{tpu_custom_call.1} parent=1 // pred_check
      _
    $region47: #{tpu_custom_call.1} parent=1 // pred_check_branch
      %71 = sbr.rel (0) target = $region49
    $region48: #{tpu_custom_call.1} parent=1 // pred_region
      %72 = dma.done [#allocation6], 2048
    $region49: #{tpu_custom_call.1} parent=1 // pred_fallthru
      _
    %v73 = vld [vmem:[%s0] sm:$0xff]
    %v74 = vld [vmem:[#allocation3] sm:$0xff]
    %v75 = vld [vmem:[#allocation3 + $0x8] sm:$0xff]
    %v76 = vld [vmem:[#allocation5] sm:$0x1]
    %v78 = vlaneseq
    %v79 = vshrl.u32 %v78, 7
    %v80 = vsub.s32 0, %v79
    %v81 = vrot.slane %v76, %v80
    %vm83 = vcmask 130048
    %v85 = vsel %vm83, %v73, 0
    %87 = vmatprep.subr.mxu0 0.0
    %88 = vmatpush1.msra.mxu0 0.0
    %89 = vmatprep.subr.mxu0 0.0
    %90 = vmatpush1.msra.mxu0 0.0
    %91 = vmatprep.subr.mxu0 0.0
    %92 = vmatpush1.msra.mxu0 0.0
    %93 = vmatprep.subr.mxu0 0.0
    %94 = vmatpush1.msra.mxu0 0.0
    %95 = vmatprep.subr.mxu0 0.0
    %96 = vmatpush1.msra.mxu0 0.0
    %97 = vmatprep.subr.mxu0 0.0
    %98 = vmatpush1.msra.mxu0 0.0
    %99 = vmatprep.subr.mxu0 0.0
    %100 = vmatpush1.msra.mxu0 0.0
    %101 = vmatprep.subr.mxu0 0.0
    %102 = vmatpush1.msra.mxu0 0.0
    %103 = vmatprep.subr.mxu0 0.0
    %104 = vmatpush1.msra.mxu0 0.0
    %105 = vmatprep.subr.mxu0 0.0
    %106 = vmatpush1.msra.mxu0 0.0
    %107 = vmatprep.subr.mxu0 0.0
    %108 = vmatpush1.msra.mxu0 0.0
    %109 = vmatprep.subr.mxu0 0.0
    %110 = vmatpush1.msra.mxu0 0.0
    %111 = vmatprep.subr.mxu0 0.0
    %112 = vmatpush1.msra.mxu0 0.0
    %113 = vmatprep.subr.mxu0 0.0
    %114 = vmatpush1.msra.mxu0 0.0
    %115 = vmatprep.subr.mxu0 0.0
    %116 = vmatpush1.msra.mxu0 %v75
    %117 = vmatprep.subr.mxu0 0.0
    %118 = vmatpush1.msra.mxu0 %v74
    %119 = vmatprep.subr.mxu0 0.0
    %120 = vmatpush2.msra.mxu0 0.0
    %121 = vmatprep.subr.mxu0 0.0
    %122 = vmatpush2.msra.mxu0 0.0
    %123 = vmatprep.subr.mxu0 0.0
    %124 = vmatpush2.msra.mxu0 0.0
    %125 = vmatprep.subr.mxu0 0.0
    %126 = vmatpush2.msra.mxu0 0.0
    %127 = vmatprep.subr.mxu0 0.0
    %128 = vmatpush2.msra.mxu0 0.0
    %129 = vmatprep.subr.mxu0 0.0
    %130 = vmatpush2.msra.mxu0 0.0
    %131 = vmatprep.subr.mxu0 0.0
    %132 = vmatpush2.msra.mxu0 0.0
    %133 = vmatprep.subr.mxu0 0.0
    %134 = vmatpush2.msra.mxu0 0.0
    %135 = vmatprep.subr.mxu0 0.0
    %136 = vmatpush2.msra.mxu0 0.0
    %137 = vmatprep.subr.mxu0 0.0
    %138 = vmatpush2.msra.mxu0 0.0
    %139 = vmatprep.subr.mxu0 0.0
    %140 = vmatpush2.msra.mxu0 0.0
    %141 = vmatprep.subr.mxu0 0.0
    %142 = vmatpush2.msra.mxu0 0.0
    %143 = vmatprep.subr.mxu0 0.0
    %144 = vmatpush2.msra.mxu0 0.0
    %145 = vmatprep.subr.mxu0 0.0
    %146 = vmatpush2.msra.mxu0 0.0
    %147 = vmatprep.subr.mxu0 0.0
    %148 = vmatpush2.msra.mxu0 0.0
    %149 = vmatprep.subr.mxu0 0.0
    %150 = vmatpush2.msra.mxu0 0.0
    %151 = vmatprep.mubr.f32.mxu0 0.0
    %152 = vmatmul.mubr.f32.gmra.mxu0 %v85
    %v153 = vpop.f32.mrf.mxu0
    %v154 = vadd.f32 %v81, %v153
    %v155 = vpop.f32.mrf.mxu0
    %156 = vdwg.mxu0
    %v157 = vmax.f32 %v154, 0.0
    %v158 = vld [vmem:[%s3] sm:$0xff]
    %v159 = vld [vmem:[%s3 + $0x8] sm:$0xff]
    %v160 = vld [vmem:[%s3 + $0x10] sm:$0xff]
    %v161 = vld [vmem:[%s3 + $0x18] sm:$0xff]
    %v162 = vld [vmem:[%s3 + $0x20] sm:$0xff]
    %v163 = vld [vmem:[%s3 + $0x28] sm:$0xff]
    %v164 = vld [vmem:[%s3 + $0x30] sm:$0xff]
    %v165 = vld [vmem:[%s3 + $0x38] sm:$0xff]
    %v166 = vld [vmem:[%s3 + $0x40] sm:$0xff]
    %v167 = vld [vmem:[%s3 + $0x48] sm:$0xff]
    %v168 = vld [vmem:[%s3 + $0x50] sm:$0xff]
    %v169 = vld [vmem:[%s3 + $0x58] sm:$0xff]
    %v170 = vld [vmem:[%s3 + $0x60] sm:$0xff]
    %v171 = vld [vmem:[%s3 + $0x68] sm:$0xff]
    %v172 = vld [vmem:[%s3 + $0x70] sm:$0xff]
    %v173 = vld [vmem:[%s3 + $0x78] sm:$0xff]
    %v174 = vld [vmem:[%s4] sm:$0x1]
    %v176 = vlaneseq
    %v177 = vshrl.u32 %v176, 7
    %v178 = vsub.s32 0, %v177
    %v179 = vrot.slane %v174, %v178
    %181 = vmatprep.subr.mxu0 0.0
    %182 = vmatpush1.msra.mxu0 %v173
    %183 = vmatprep.subr.mxu0 0.0
    %184 = vmatpush1.msra.mxu0 %v172
    %185 = vmatprep.subr.mxu0 0.0
    %186 = vmatpush1.msra.mxu0 %v171
    %187 = vmatprep.subr.mxu0 0.0
    %188 = vmatpush1.msra.mxu0 %v170
    %189 = vmatprep.subr.mxu0 0.0
    %190 = vmatpush1.msra.mxu0 %v169
    %191 = vmatprep.subr.mxu0 0.0
    %192 = vmatpush1.msra.mxu0 %v168
    %193 = vmatprep.subr.mxu0 0.0
    %194 = vmatpush1.msra.mxu0 %v167
    %195 = vmatprep.subr.mxu0 0.0
    %196 = vmatpush1.msra.mxu0 %v166
    %197 = vmatprep.subr.mxu0 0.0
    %198 = vmatpush1.msra.mxu0 %v165
    %199 = vmatprep.subr.mxu0 0.0
    %200 = vmatpush1.msra.mxu0 %v164
    %201 = vmatprep.subr.mxu0 0.0
    %202 = vmatpush1.msra.mxu0 %v163
    %203 = vmatprep.subr.mxu0 0.0
    %204 = vmatpush1.msra.mxu0 %v162
    %205 = vmatprep.subr.mxu0 0.0
    %206 = vmatpush1.msra.mxu0 %v161
    %207 = vmatprep.subr.mxu0 0.0
    %208 = vmatpush1.msra.mxu0 %v160
    %209 = vmatprep.subr.mxu0 0.0
    %210 = vmatpush1.msra.mxu0 %v159
    %211 = vmatprep.subr.mxu0 0.0
    %212 = vmatpush1.msra.mxu0 %v158
    %213 = vmatprep.subr.mxu0 0.0
    %214 = vmatpush2.msra.mxu0 0.0
    %215 = vmatprep.subr.mxu0 0.0
    %216 = vmatpush2.msra.mxu0 0.0
    %217 = vmatprep.subr.mxu0 0.0
    %218 = vmatpush2.msra.mxu0 0.0
    %219 = vmatprep.subr.mxu0 0.0
    %220 = vmatpush2.msra.mxu0 0.0
    %221 = vmatprep.subr.mxu0 0.0
    %222 = vmatpush2.msra.mxu0 0.0
    %223 = vmatprep.subr.mxu0 0.0
    %224 = vmatpush2.msra.mxu0 0.0
    %225 = vmatprep.subr.mxu0 0.0
    %226 = vmatpush2.msra.mxu0 0.0
    %227 = vmatprep.subr.mxu0 0.0
    %228 = vmatpush2.msra.mxu0 0.0
    %229 = vmatprep.subr.mxu0 0.0
    %230 = vmatpush2.msra.mxu0 0.0
    %231 = vmatprep.subr.mxu0 0.0
    %232 = vmatpush2.msra.mxu0 0.0
    %233 = vmatprep.subr.mxu0 0.0
    %234 = vmatpush2.msra.mxu0 0.0
    %235 = vmatprep.subr.mxu0 0.0
    %236 = vmatpush2.msra.mxu0 0.0
    %237 = vmatprep.subr.mxu0 0.0
    %238 = vmatpush2.msra.mxu0 0.0
    %239 = vmatprep.subr.mxu0 0.0
    %240 = vmatpush2.msra.mxu0 0.0
    %241 = vmatprep.subr.mxu0 0.0
    %242 = vmatpush2.msra.mxu0 0.0
    %243 = vmatprep.subr.mxu0 0.0
    %244 = vmatpush2.msra.mxu0 0.0
    %245 = vmatprep.mubr.f32.mxu0 0.0
    %246 = vmatmul.mubr.f32.gmra.mxu0 %v157
    %v247 = vpop.f32.mrf.mxu0
    %v248 = vadd.f32 %v179, %v247
    %v249 = vpop.f32.mrf.mxu0
    %250 = vdwg.mxu0
    %v251 = vmax.f32 %v248, 0.0
    %v252 = vld [vmem:[#allocation7] sm:$0xff]
    %v253 = vld [vmem:[#allocation7 + $0x8] sm:$0xff]
    %v254 = vld [vmem:[#allocation7 + $0x10] sm:$0xff]
    %v255 = vld [vmem:[#allocation7 + $0x18] sm:$0xff]
    %v256 = vld [vmem:[#allocation7 + $0x20] sm:$0xff]
    %v257 = vld [vmem:[#allocation7 + $0x28] sm:$0xff]
    %v258 = vld [vmem:[#allocation7 + $0x30] sm:$0xff]
    %v259 = vld [vmem:[#allocation7 + $0x38] sm:$0xff]
    %v260 = vld [vmem:[#allocation7 + $0x40] sm:$0xff]
    %v261 = vld [vmem:[#allocation7 + $0x48] sm:$0xff]
    %v262 = vld [vmem:[#allocation7 + $0x50] sm:$0xff]
    %v263 = vld [vmem:[#allocation7 + $0x58] sm:$0xff]
    %v264 = vld [vmem:[#allocation7 + $0x60] sm:$0xff]
    %v265 = vld [vmem:[#allocation7 + $0x68] sm:$0xff]
    %v266 = vld [vmem:[#allocation7 + $0x70] sm:$0xff]
    %v267 = vld [vmem:[#allocation7 + $0x78] sm:$0xff]
    %v268 = vld [vmem:[%s6] sm:$0x1]
    %v270 = vlaneseq
    %v271 = vshrl.u32 %v270, 7
    %v272 = vsub.s32 0, %v271
    %v273 = vrot.slane %v268, %v272
    %275 = vmatprep.subr.mxu0 0.0
    %276 = vmatpush1.msra.mxu0 %v267
    %277 = vmatprep.subr.mxu0 0.0
    %278 = vmatpush1.msra.mxu0 %v266
    %279 = vmatprep.subr.mxu0 0.0
    %280 = vmatpush1.msra.mxu0 %v265
    %281 = vmatprep.subr.mxu0 0.0
    %282 = vmatpush1.msra.mxu0 %v264
    %283 = vmatprep.subr.mxu0 0.0
    %284 = vmatpush1.msra.mxu0 %v263
    %285 = vmatprep.subr.mxu0 0.0
    %286 = vmatpush1.msra.mxu0 %v262
    %287 = vmatprep.subr.mxu0 0.0
    %288 = vmatpush1.msra.mxu0 %v261
    %289 = vmatprep.subr.mxu0 0.0
    %290 = vmatpush1.msra.mxu0 %v260
    %291 = vmatprep.subr.mxu0 0.0
    %292 = vmatpush1.msra.mxu0 %v259
    %293 = vmatprep.subr.mxu0 0.0
    %294 = vmatpush1.msra.mxu0 %v258
    %295 = vmatprep.subr.mxu0 0.0
    %296 = vmatpush1.msra.mxu0 %v257
    %297 = vmatprep.subr.mxu0 0.0
    %298 = vmatpush1.msra.mxu0 %v256
    %299 = vmatprep.subr.mxu0 0.0
    %300 = vmatpush1.msra.mxu0 %v255
    %301 = vmatprep.subr.mxu0 0.0
    %302 = vmatpush1.msra.mxu0 %v254
    %303 = vmatprep.subr.mxu0 0.0
    %304 = vmatpush1.msra.mxu0 %v253
    %305 = vmatprep.subr.mxu0 0.0
    %306 = vmatpush1.msra.mxu0 %v252
    %307 = vmatprep.subr.mxu0 0.0
    %308 = vmatpush2.msra.mxu0 0.0
    %309 = vmatprep.subr.mxu0 0.0
    %310 = vmatpush2.msra.mxu0 0.0
    %311 = vmatprep.subr.mxu0 0.0
    %312 = vmatpush2.msra.mxu0 0.0
    %313 = vmatprep.subr.mxu0 0.0
    %314 = vmatpush2.msra.mxu0 0.0
    %315 = vmatprep.subr.mxu0 0.0
    %316 = vmatpush2.msra.mxu0 0.0
    %317 = vmatprep.subr.mxu0 0.0
    %318 = vmatpush2.msra.mxu0 0.0
    %319 = vmatprep.subr.mxu0 0.0
    %320 = vmatpush2.msra.mxu0 0.0
    %321 = vmatprep.subr.mxu0 0.0
    %322 = vmatpush2.msra.mxu0 0.0
    %323 = vmatprep.subr.mxu0 0.0
    %324 = vmatpush2.msra.mxu0 0.0
    %325 = vmatprep.subr.mxu0 0.0
    %326 = vmatpush2.msra.mxu0 0.0
    %327 = vmatprep.subr.mxu0 0.0
    %328 = vmatpush2.msra.mxu0 0.0
    %329 = vmatprep.subr.mxu0 0.0
    %330 = vmatpush2.msra.mxu0 0.0
    %331 = vmatprep.subr.mxu0 0.0
    %332 = vmatpush2.msra.mxu0 0.0
    %333 = vmatprep.subr.mxu0 0.0
    %334 = vmatpush2.msra.mxu0 0.0
    %335 = vmatprep.subr.mxu0 0.0
    %336 = vmatpush2.msra.mxu0 0.0
    %337 = vmatprep.subr.mxu0 0.0
    %338 = vmatpush2.msra.mxu0 0.0
    %339 = vmatprep.mubr.f32.mxu0 0.0
    %340 = vmatmul.mubr.f32.gmra.mxu0 %v251
    %v341 = vpop.f32.mrf.mxu0
    %v342 = vadd.f32 %v273, %v341
    %v343 = vpop.f32.mrf.mxu0
    %344 = vdwg.mxu0
    %v345 = vmax.f32 %v342, 0.0
    %v346 = vld [vmem:[%s7] sm:$0xff]
    %v347 = vld [vmem:[%s7 + $0x8] sm:$0xff]
    %v348 = vld [vmem:[%s7 + $0x10] sm:$0xff]
    %v349 = vld [vmem:[%s7 + $0x18] sm:$0xff]
    %v350 = vld [vmem:[%s7 + $0x20] sm:$0xff]
    %v351 = vld [vmem:[%s7 + $0x28] sm:$0xff]
    %v352 = vld [vmem:[%s7 + $0x30] sm:$0xff]
    %v353 = vld [vmem:[%s7 + $0x38] sm:$0xff]
    %v354 = vld [vmem:[%s7 + $0x40] sm:$0xff]
    %v355 = vld [vmem:[%s7 + $0x48] sm:$0xff]
    %v356 = vld [vmem:[%s7 + $0x50] sm:$0xff]
    %v357 = vld [vmem:[%s7 + $0x58] sm:$0xff]
    %v358 = vld [vmem:[%s7 + $0x60] sm:$0xff]
    %v359 = vld [vmem:[%s7 + $0x68] sm:$0xff]
    %v360 = vld [vmem:[%s7 + $0x70] sm:$0xff]
    %v361 = vld [vmem:[%s7 + $0x78] sm:$0xff]
    %v362 = vld [vmem:[#allocation2] sm:$0x1]
    %v364 = vlaneseq
    %v365 = vshrl.u32 %v364, 7
    %v366 = vsub.s32 0, %v365
    %v367 = vrot.slane %v362, %v366
    %369 = vmatprep.subr.mxu0 0.0
    %370 = vmatpush1.msra.mxu0 %v361
    %371 = vmatprep.subr.mxu0 0.0
    %372 = vmatpush1.msra.mxu0 %v360
    %373 = vmatprep.subr.mxu0 0.0
    %374 = vmatpush1.msra.mxu0 %v359
    %375 = vmatprep.subr.mxu0 0.0
    %376 = vmatpush1.msra.mxu0 %v358
    %377 = vmatprep.subr.mxu0 0.0
    %378 = vmatpush1.msra.mxu0 %v357
    %379 = vmatprep.subr.mxu0 0.0
    %380 = vmatpush1.msra.mxu0 %v356
    %381 = vmatprep.subr.mxu0 0.0
    %382 = vmatpush1.msra.mxu0 %v355
    %383 = vmatprep.subr.mxu0 0.0
    %384 = vmatpush1.msra.mxu0 %v354
    %385 = vmatprep.subr.mxu0 0.0
    %386 = vmatpush1.msra.mxu0 %v353
    %387 = vmatprep.subr.mxu0 0.0
    %388 = vmatpush1.msra.mxu0 %v352
    %389 = vmatprep.subr.mxu0 0.0
    %390 = vmatpush1.msra.mxu0 %v351
    %391 = vmatprep.subr.mxu0 0.0
    %392 = vmatpush1.msra.mxu0 %v350
    %393 = vmatprep.subr.mxu0 0.0
    %394 = vmatpush1.msra.mxu0 %v349
    %395 = vmatprep.subr.mxu0 0.0
    %396 = vmatpush1.msra.mxu0 %v348
    %397 = vmatprep.subr.mxu0 0.0
    %398 = vmatpush1.msra.mxu0 %v347
    %399 = vmatprep.subr.mxu0 0.0
    %400 = vmatpush1.msra.mxu0 %v346
    %401 = vmatprep.subr.mxu0 0.0
    %402 = vmatpush2.msra.mxu0 0.0
    %403 = vmatprep.subr.mxu0 0.0
    %404 = vmatpush2.msra.mxu0 0.0
    %405 = vmatprep.subr.mxu0 0.0
    %406 = vmatpush2.msra.mxu0 0.0
    %407 = vmatprep.subr.mxu0 0.0
    %408 = vmatpush2.msra.mxu0 0.0
    %409 = vmatprep.subr.mxu0 0.0
    %410 = vmatpush2.msra.mxu0 0.0
    %411 = vmatprep.subr.mxu0 0.0
    %412 = vmatpush2.msra.mxu0 0.0
    %413 = vmatprep.subr.mxu0 0.0
    %414 = vmatpush2.msra.mxu0 0.0
    %415 = vmatprep.subr.mxu0 0.0
    %416 = vmatpush2.msra.mxu0 0.0
    %417 = vmatprep.subr.mxu0 0.0
    %418 = vmatpush2.msra.mxu0 0.0
    %419 = vmatprep.subr.mxu0 0.0
    %420 = vmatpush2.msra.mxu0 0.0
    %421 = vmatprep.subr.mxu0 0.0
    %422 = vmatpush2.msra.mxu0 0.0
    %423 = vmatprep.subr.mxu0 0.0
    %424 = vmatpush2.msra.mxu0 0.0
    %425 = vmatprep.subr.mxu0 0.0
    %426 = vmatpush2.msra.mxu0 0.0
    %427 = vmatprep.subr.mxu0 0.0
    %428 = vmatpush2.msra.mxu0 0.0
    %429 = vmatprep.subr.mxu0 0.0
    %430 = vmatpush2.msra.mxu0 0.0
    %431 = vmatprep.subr.mxu0 0.0
    %432 = vmatpush2.msra.mxu0 0.0
    %433 = vmatprep.mubr.f32.mxu0 0.0
    %434 = vmatmul.mubr.f32.gmra.mxu0 %v345
    %v435 = vpop.f32.mrf.mxu0
    %v436 = vadd.f32 %v367, %v435
    %v437 = vpop.f32.mrf.mxu0
    %438 = vdwg.mxu0
    %vm439 = vcmask 7168
    %440 = vst.msk [vmem:[%s9] sm:$0xff] %vm439, %v436
    // Predicated region
    $region50: #{tpu_custom_call.1} parent=1 // pred_check
      _
    $region51: #{tpu_custom_call.1} parent=1 // pred_check_branch
      %442 = sbr.rel (0) target = $region53
    $region52: #{tpu_custom_call.1} parent=1 // pred_region
      _
    $region53: #{tpu_custom_call.1} parent=1 // pred_fallthru
      _
    // Predicated region
    $region54: #{tpu_custom_call.1} parent=1 // pred_check
      _
    $region55: #{tpu_custom_call.1} parent=1 // pred_check_branch
      %444 = sbr.rel (0) target = $region57
    $region56: #{tpu_custom_call.1} parent=1 // pred_region
      _
    $region57: #{tpu_custom_call.1} parent=1 // pred_fallthru
      _
    %445 = vsyncpa [#allocation4], 1
    %446 = vsyncpa [#allocation6], 1

</llo_original>
